<compile_context>
chip_gen: v5e
topology: v5e:2x2
jax: 0.10.0
libtpu: 0.0.40
codegen_flags: <defaults>
</compile_context>

<pallas_src>
import functools
import math

import numpy as np
import jax
import jax.numpy as jnp
from jax.experimental import pallas as pl
from jax.experimental.pallas import tpu as pltpu  # noqa: F401  (TPU backend)


_PYRAMID_LEVELS = (3, 4, 5)
_STRIDES = tuple(2 ** p for p in _PYRAMID_LEVELS)
_SIZES = (2.0 ** 4.0, 2.0 ** 6.0, 2.0 ** 8.0)
_SCALES = (2.0 ** 0.0, 2.0 ** 0.5, 2.0 ** 1.0)
_A = len(_SCALES)          # base anchors per grid cell
_LANE_CAP = 6144           # upper bound on folded lane width


def _segment_table(ws, stride, base_size, fold):
    """Host-side (numpy) const/step lane tables for one level.

    Lane j encodes (dky, kx, a, c) row-major (dky in [0, fold)).
    value(row r, lane j) = const[j] + step[j] * r, with ky = r*fold + dky:
      x coords: (kx + 0.5)*stride + base_x(a)          (step = 0)
      y coords: (dky + 0.5)*stride + base_y(a) + r*fold*stride
    """
    half = 0.5 * base_size * np.asarray(_SCALES, dtype=np.float64)        # (A,)
    sign = np.array([-1.0, -1.0, 1.0, 1.0], dtype=np.float64)             # (4,)
    is_y = np.array([0.0, 1.0, 0.0, 1.0], dtype=np.float64)               # (4,)
    base = sign[None, :] * half[:, None]                                  # (A, 4)
    kx = np.arange(ws, dtype=np.float64)
    dky = np.arange(fold, dtype=np.float64)
    const = ((kx[None, :, None, None] + 0.5) * stride * (1.0 - is_y)
             + (dky[:, None, None, None] + 0.5) * stride * is_y
             + base[None, None, :, :])                                    # (fold, ws, A, 4)
    step = np.broadcast_to(fold * stride * is_y, const.shape)
    return const.reshape(-1).astype(np.float32), step.reshape(-1).astype(np.float32)


@functools.lru_cache(maxsize=None)
def _build_anchor_fn(H, W):
    # Per-level grid geometry (ceil division, identical to the reference).
    geoms = []
    for idx, p in enumerate(_PYRAMID_LEVELS):
        hs = (H + 2 ** p - 1) // (2 ** p)
        ws = (W + 2 ** p - 1) // (2 ** p)
        geoms.append((hs, ws, float(_STRIDES[idx]), float(_SIZES[idx])))
    units = [ws * _A * 4 for (_, ws, _, _) in geoms]   # unfolded lane width per level

    # --- try "stacked" mode: one common lane width L for all levels ----------
    base_l = functools.reduce(math.lcm, units)
    stacked_L = None
    k = 1
    while k * base_l <= _LANE_CAP:
        L = k * base_l
        if all(hs % (L // u) == 0 for (hs, _, _, _), u in zip(geoms, units)):
            stacked_L = L                      # keep the largest valid width
        k += 1

    consts, steps, plan = [], [], []           # plan: (out_idx, row_off, rows, tab_row, width)
    if stacked_L is not None:
        L = stacked_L
        row_off = 0
        for seg, ((hs, ws, stride, size), u) in enumerate(zip(geoms, units)):
            fold = L // u
            rows = hs // fold
            c, s = _segment_table(ws, stride, size, fold)
            consts.append(c)
            steps.append(s)
            plan.append((0, row_off, rows, 2 * seg, L))
            row_off += rows
        out_shapes = [jax.ShapeDtypeStruct((row_off, L), jnp.float32)]
        lane_max = L
    else:
        # Ragged fallback: one lane-dense output per level (widest fold that
        # divides Hs_l), single concat in the wrapper.
        out_shapes = []
        for seg, ((hs, ws, stride, size), u) in enumerate(zip(geoms, units)):
            divs = [d for d in range(1, hs + 1) if hs % d == 0 and d * u <= _LANE_CAP]
            fold = max(divs) if divs else 1
            rows = hs // fold
            width = fold * u
            c, s = _segment_table(ws, stride, size, fold)
            consts.append(c)
            steps.append(s)
            plan.append((seg, 0, rows, 2 * seg, width))
            out_shapes.append(jax.ShapeDtypeStruct((rows, width), jnp.float32))
        lane_max = max(op[4] for op in plan)

    # Single merged table input: rows (2l, 2l+1) = (const, step) of level l,
    # zero-padded on the lane axis to the common width.
    n_seg = len(geoms)
    table_np = np.zeros((2 * n_seg, lane_max), dtype=np.float32)
    for seg in range(n_seg):
        w = consts[seg].shape[0]
        table_np[2 * seg, :w] = consts[seg]
        table_np[2 * seg + 1, :w] = steps[seg]
    table = jnp.asarray(table_np)

    def kernel(tab_ref, *o_refs):
        # out[r, j] = const[j] + step[j] * r  -> one multiply-add per element,
        # followed by wide lane-dense stores.
        for (oi, roff, rows, trow, width) in plan:
            o_ref = o_refs[oi]
            r = jax.lax.broadcasted_iota(jnp.int32, (rows, 1), 0).astype(jnp.float32)
            cst = tab_ref[trow:trow + 1, :][:, :width]         # (1, width)
            stp = tab_ref[trow + 1:trow + 2, :][:, :width]     # (1, width)
            o_ref[pl.ds(roff, rows), :] = cst + stp * r        # (rows, width)

    in_specs = [pl.BlockSpec(table.shape, lambda: (0, 0))]
    if len(out_shapes) == 1:
        out_shape = out_shapes[0]
        out_specs = pl.BlockSpec(out_shape.shape, lambda: (0, 0))
    else:
        out_shape = tuple(out_shapes)
        out_specs = tuple(pl.BlockSpec(s.shape, lambda: (0, 0)) for s in out_shapes)

    call = pl.pallas_call(
        kernel,
        out_shape=out_shape,
        in_specs=in_specs,
        out_specs=out_specs,
    )

    def fn():
        outs = call(table)
        if isinstance(outs, (list, tuple)):
            flat = jnp.concatenate([o.reshape(-1) for o in outs])
        else:
            flat = outs.reshape(-1)      # free: stacked layout is already the flat order
        return flat.reshape(-1, 4)[None, ...]   # (1, K_total*A, 4)

    return fn


def anchors_forward(image):
    """JAX/Pallas equivalent of Anchors.forward(image) (NCHW input)."""
    H, W = int(image.shape[2]), int(image.shape[3])
    return _build_anchor_fn(H, W)()


# ---------------- numpy reference (verbatim semantics of the PyTorch module) ---
def _ref_generate_anchors(base_size, scales):
    num_anchors = len(scales)
    anchors = np.zeros((num_anchors, 4))
    anchors[:, 2:] = base_size * np.tile(scales, (2, 1)).T
    anchors[:, 0::2] -= np.tile(anchors[:, 2] * 0.5, (2, 1)).T
    anchors[:, 1::2] -= np.tile(anchors[:, 3] * 0.5, (2, 1)).T
    return anchors


def _ref_shift(shape, stride, anchors):
    shift_x = (np.arange(0, shape[1]) + 0.5) * stride
    shift_y = (np.arange(0, shape[0]) + 0.5) * stride
    shift_x, shift_y = np.meshgrid(shift_x, shift_y)
    shifts = np.vstack((shift_x.ravel(), shift_y.ravel(),
                        shift_x.ravel(), shift_y.ravel())).transpose()
    A = anchors.shape[0]
    K = shifts.shape[0]
    all_anchors = anchors.reshape((1, A, 4)) + shifts.reshape((1, K, 4)).transpose((1, 0, 2))
    return all_anchors.reshape((K * A, 4))


def _ref_anchors_forward(image_shape_hw):
    pyramid_levels = [3, 4, 5]
    strides = [2 ** x for x in pyramid_levels]
    sizes = [2.0 ** 4.0, 2.0 ** 6.0, 2.0 ** 8.0]
    scales = np.array([2.0 ** 0.0, 2.0 ** 0.5, 2.0 ** 1.0])
    image_shape = np.array(image_shape_hw)
    image_shapes = [(image_shape + 2 ** x - 1) // 2 ** x for x in pyramid_levels]
    all_anchors = np.zeros((0, 4)).astype(np.float32)
    for idx, _ in enumerate(pyramid_levels):
        anchors = _ref_generate_anchors(base_size=sizes[idx], scales=scales)
        shifted = _ref_shift(image_shapes[idx], strides[idx], anchors)
        all_anchors = np.append(all_anchors, shifted, axis=0)
    return np.expand_dims(all_anchors, axis=0).astype(np.float32)


if __name__ == "__main__":
    key = jax.random.PRNGKey(0)

    # NCHW input; only the spatial shape matters (exactly as in the PyTorch forward).
    x = jax.random.normal(key, (2, 4, 16, 16), dtype=jnp.float32)
    out = jax.block_until_ready(anchors_forward(x))
    ref = _ref_anchors_forward((x.shape[2], x.shape[3]))
    assert out.shape == ref.shape, (out.shape, ref.shape)
    np.testing.assert_allclose(np.asarray(out), ref, rtol=1e-5, atol=1e-4)

    # Also exercise the stacked single-output fast path (shape admits a common fold).
    x2 = jax.random.normal(key, (1, 3, 128, 128), dtype=jnp.float32)
    out2 = jax.block_until_ready(anchors_forward(x2))
    ref2 = _ref_anchors_forward((x2.shape[2], x2.shape[3]))
    assert out2.shape == ref2.shape, (out2.shape, ref2.shape)
    np.testing.assert_allclose(np.asarray(out2), ref2, rtol=1e-5, atol=1e-4)

    print("KERNEL_OK")
</pallas_src>

<mosaic_0001>
module attributes {stable_mosaic.version = 11 : i64} {
  func.func @kernel(%arg0: memref<6x48xf32, #tpu.memory_space<vmem>>, %arg1: memref<1x48xf32, #tpu.memory_space<vmem>>, %arg2: memref<1x12xf32, #tpu.memory_space<vmem>>, %arg3: memref<1x12xf32, #tpu.memory_space<vmem>>) attributes {dimension_semantics = [], scalar_prefetch = 0 : i64, scratch_operands = 0 : i64, tpu.core_type = #tpu.core_type<tc>} {
    %0 = tpu.iota {dimensions = array<i32: 0>} : vector<1x1xi32>
    %1 = arith.sitofp %0 : vector<1x1xi32> to vector<1x1xf32>
    %c0 = arith.constant 0 : index
    %c0_0 = arith.constant 0 : index
    %2 = vector.load %arg0[%c0, %c0_0] : memref<6x48xf32, #tpu.memory_space<vmem>>, vector<1x48xf32>
    %c1 = arith.constant 1 : index
    %c0_1 = arith.constant 0 : index
    %3 = vector.load %arg0[%c1, %c0_1] : memref<6x48xf32, #tpu.memory_space<vmem>>, vector<1x48xf32>
    %4 = vector.broadcast %1 : vector<1x1xf32> to vector<1x48xf32>
    %5 = arith.mulf %3, %4 : vector<1x48xf32>
    %6 = arith.addf %2, %5 : vector<1x48xf32>
    %c0_2 = arith.constant 0 : index
    %c0_3 = arith.constant 0 : index
    %7 = vector.load %arg1[%c0_2, %c0_3] : memref<1x48xf32, #tpu.memory_space<vmem>>, vector<1x48xf32>
    tpu.vector_store %arg1[%c0_2, %c0_3], %6 {strides = array<i32>} : memref<1x48xf32, #tpu.memory_space<vmem>>, vector<1x48xf32>,
    %8 = tpu.iota {dimensions = array<i32: 0>} : vector<1x1xi32>
    %9 = arith.sitofp %8 : vector<1x1xi32> to vector<1x1xf32>
    %c2 = arith.constant 2 : index
    %c0_4 = arith.constant 0 : index
    %10 = vector.load %arg0[%c2, %c0_4] : memref<6x48xf32, #tpu.memory_space<vmem>>, vector<1x48xf32>
    %11 = vector.extract_strided_slice %10 {offsets = [0, 0], sizes = [1, 12], strides = [1, 1]} : vector<1x48xf32> to vector<1x12xf32>
    %c3 = arith.constant 3 : index
    %c0_5 = arith.constant 0 : index
    %12 = vector.load %arg0[%c3, %c0_5] : memref<6x48xf32, #tpu.memory_space<vmem>>, vector<1x48xf32>
    %13 = vector.extract_strided_slice %12 {offsets = [0, 0], sizes = [1, 12], strides = [1, 1]} : vector<1x48xf32> to vector<1x12xf32>
    %14 = vector.broadcast %9 : vector<1x1xf32> to vector<1x12xf32>
    %15 = arith.mulf %13, %14 : vector<1x12xf32>
    %16 = arith.addf %11, %15 : vector<1x12xf32>
    %c0_6 = arith.constant 0 : index
    %c0_7 = arith.constant 0 : index
    %17 = vector.load %arg2[%c0_6, %c0_7] : memref<1x12xf32, #tpu.memory_space<vmem>>, vector<1x12xf32>
    tpu.vector_store %arg2[%c0_6, %c0_7], %16 {strides = array<i32>} : memref<1x12xf32, #tpu.memory_space<vmem>>, vector<1x12xf32>,
    %18 = tpu.iota {dimensions = array<i32: 0>} : vector<1x1xi32>
    %19 = arith.sitofp %18 : vector<1x1xi32> to vector<1x1xf32>
    %c4 = arith.constant 4 : index
    %c0_8 = arith.constant 0 : index
    %20 = vector.load %arg0[%c4, %c0_8] : memref<6x48xf32, #tpu.memory_space<vmem>>, vector<1x48xf32>
    %21 = vector.extract_strided_slice %20 {offsets = [0, 0], sizes = [1, 12], strides = [1, 1]} : vector<1x48xf32> to vector<1x12xf32>
    %c5 = arith.constant 5 : index
    %c0_9 = arith.constant 0 : index
    %22 = vector.load %arg0[%c5, %c0_9] : memref<6x48xf32, #tpu.memory_space<vmem>>, vector<1x48xf32>
    %23 = vector.extract_strided_slice %22 {offsets = [0, 0], sizes = [1, 12], strides = [1, 1]} : vector<1x48xf32> to vector<1x12xf32>
    %24 = vector.broadcast %19 : vector<1x1xf32> to vector<1x12xf32>
    %25 = arith.mulf %23, %24 : vector<1x12xf32>
    %26 = arith.addf %21, %25 : vector<1x12xf32>
    %c0_10 = arith.constant 0 : index
    %c0_11 = arith.constant 0 : index
    %27 = vector.load %arg3[%c0_10, %c0_11] : memref<1x12xf32, #tpu.memory_space<vmem>>, vector<1x12xf32>
    tpu.vector_store %arg3[%c0_10, %c0_11], %26 {strides = array<i32>} : memref<1x12xf32, #tpu.memory_space<vmem>>, vector<1x12xf32>,
    return
  }
}

</mosaic_0001>

<llo_original>
// kernel: tpu_custom_call.1
$region0: #{tpu_custom_call.1}
  #allocation0 [shape = 'u32[]', space=smem, size = 0x4, offset = 0x4, fixed_abs, tag = 'smem constant byte address 0x4 - core index']
  #allocation1 [shape = 'u32[72,128]{1,0:T(1,128)}', space=vmem, size = 0x9000, scoped, tag = 'internal scratch']
  %s0 = inlined_call_operand.hbm [shape: f32[6,48], index: 0, kind: input, shape index: {}]
  %s1 = inlined_call_operand.hbm [shape: f32[1,48], index: 1, kind: output, shape index: {0}]
  %s2 = inlined_call_operand.hbm [shape: f32[1,12], index: 2, kind: output, shape index: {1}]
  %s3 = inlined_call_operand.hbm [shape: f32[1,12], index: 3, kind: output, shape index: {2}]
  %4 = xla_tuple %s1, %s2, %s3
  %s5 = sld [smem:[#allocation0]]
  $region34: #{tpu_custom_call.1} parent=0
    _
  %s7 = ssub.s32 1, %s5
  %s8 = scalar_select 0, %s7, %s5
  $region1: #{tpu_custom_call.1} parent=0
    #allocation2 [shape = 'u8[4096]{0}', space=vmem, size = 0x1000, scoped, tag = 'input window, operand 0, single buffered']
    #allocation3 [shape = 's32[1]{0}', space=sflag, size = 0x4, scoped, tag = 'scoped memory for tpu_custom_call.1']
    #allocation4 [shape = 's32[1]{0}', space=sflag, size = 0x4, scoped, tag = 'scoped memory for tpu_custom_call.1']
    #allocation5 [shape = 'u8[512]{0}', space=vmem, size = 0x400, scoped, tag = 'output window, operand 0, single buffered']
    #allocation6 [shape = 'u8[512]{0}', space=vmem, size = 0x400, scoped, tag = 'output window, operand 1, single buffered']
    #allocation7 [shape = 's32[1]{0}', space=sflag, size = 0x4, scoped, tag = 'scoped memory for tpu_custom_call.1']
    #allocation8 [shape = 'u8[512]{0}', space=vmem, size = 0x400, scoped, tag = 'output window, operand 2, single buffered']
    %9 = vsyncpa [#allocation3], 0
    %10 = vsyncpa [#allocation4], 0
    %11 = vsyncpa [#allocation7], 0
    // Predicated region
    $region2: #{tpu_custom_call.1} parent=1 // pred_check
      _
    $region3: #{tpu_custom_call.1} parent=1 // pred_check_branch
      %13 = sbr.rel (0) target = $region5
    $region4: #{tpu_custom_call.1} parent=1 // pred_region
      %15 = vsyncadd [#allocation3], 0
      %s17 = sshll.u32 %s0, 4
      %s18 = int_to_ptr.hbm [resolvable:$true] %s17
      %s19 = sshll.u32 [#allocation2], 4
      %s20 = int_to_ptr.vmem [resolvable:$true] %s19
      %22 = dma.hbm_to_vmem [thread:$0]  %s18, 128, %s20, [#allocation3]
    $region5: #{tpu_custom_call.1} parent=1 // pred_fallthru
      _
    // Predicated region
    $region6: #{tpu_custom_call.1} parent=1 // pred_check
      _
    $region7: #{tpu_custom_call.1} parent=1 // pred_check_branch
      %24 = sbr.rel (0) target = $region9
    $region8: #{tpu_custom_call.1} parent=1 // pred_region
      %26 = dma.done [#allocation3], 128
    $region9: #{tpu_custom_call.1} parent=1 // pred_fallthru
      _
    %v27 = vlaneseq
    %v28 = vshrl.u32 %v27, 7
    %v29 = vcvt.s32.f32 %v28
    %v30 = vld [vmem:[#allocation2] sm:$0x1]
    %v31 = vld [vmem:[#allocation2 + $0x1] sm:$0x1]
    %v32 = vmul.f32 %v31, %v29
    %v33 = vadd.f32 %v30, %v32
    %vm34 = vcmask 385024
    %35 = vst.msk [vmem:[#allocation5] sm:$0x1] %vm34, %v33
    %v36 = vld [vmem:[#allocation2 + $0x2] sm:$0x1]
    %v37 = vld [vmem:[#allocation2 + $0x3] sm:$0x1]
    %v38 = vmul.f32 %v37, %v29
    %v39 = vadd.f32 %v36, %v38
    %vm40 = vcmask 90112
    %41 = vst.msk [vmem:[#allocation6] sm:$0x1] %vm40, %v39
    %v42 = vld [vmem:[#allocation2 + $0x4] sm:$0x1]
    %v43 = vld [vmem:[#allocation2 + $0x5] sm:$0x1]
    %v44 = vmul.f32 %v43, %v29
    %v45 = vadd.f32 %v42, %v44
    %46 = vst.msk [vmem:[#allocation8] sm:$0x1] %vm40, %v45
    // Predicated region
    $region10: #{tpu_custom_call.1} parent=1 // pred_check
      _
    $region11: #{tpu_custom_call.1} parent=1 // pred_check_branch
      %48 = sbr.rel (0) target = $region13
    $region12: #{tpu_custom_call.1} parent=1 // pred_region
      %50 = vsyncadd [#allocation4], 0
      %s52 = sshll.u32 [#allocation5], 4
      %s53 = int_to_ptr.vmem [resolvable:$true] %s52
      %s54 = sshll.u32 %s1, 4
      %s55 = int_to_ptr.hbm [resolvable:$true] %s54
      %57 = dma.vmem_to_hbm [thread:$0]  %s53, 16, %s55, [#allocation4]
    $region13: #{tpu_custom_call.1} parent=1 // pred_fallthru
      _
    // Predicated region
    $region14: #{tpu_custom_call.1} parent=1 // pred_check
      _
    $region15: #{tpu_custom_call.1} parent=1 // pred_check_branch
      %59 = sbr.rel (0) target = $region17
    $region16: #{tpu_custom_call.1} parent=1 // pred_region
      %61 = vsyncadd [#allocation7], 0
      %s63 = sshll.u32 [#allocation6], 4
      %s64 = int_to_ptr.vmem [resolvable:$true] %s63
      %s65 = sshll.u32 %s2, 4
      %s66 = int_to_ptr.hbm [resolvable:$true] %s65
      %68 = dma.vmem_to_hbm [thread:$0]  %s64, 16, %s66, [#allocation7]
    $region17: #{tpu_custom_call.1} parent=1 // pred_fallthru
      _
    // Predicated region
    $region18: #{tpu_custom_call.1} parent=1 // pred_check
      _
    $region19: #{tpu_custom_call.1} parent=1 // pred_check_branch
      %70 = sbr.rel (0) target = $region21
    $region20: #{tpu_custom_call.1} parent=1 // pred_region
      %72 = vsyncadd [#allocation7], 0
      %s74 = sshll.u32 [#allocation8], 4
      %s75 = int_to_ptr.vmem [resolvable:$true] %s74
      %s76 = sshll.u32 %s3, 4
      %s77 = int_to_ptr.hbm [resolvable:$true] %s76
      %79 = dma.vmem_to_hbm [thread:$0]  %s75, 16, %s77, [#allocation7]
    $region21: #{tpu_custom_call.1} parent=1 // pred_fallthru
      _
    // Predicated region
    $region22: #{tpu_custom_call.1} parent=1 // pred_check
      _
    $region23: #{tpu_custom_call.1} parent=1 // pred_check_branch
      %81 = sbr.rel (0) target = $region25
    $region24: #{tpu_custom_call.1} parent=1 // pred_region
      %83 = dma.done [#allocation4], 16
    $region25: #{tpu_custom_call.1} parent=1 // pred_fallthru
      _
    // Predicated region
    $region26: #{tpu_custom_call.1} parent=1 // pred_check
      _
    $region27: #{tpu_custom_call.1} parent=1 // pred_check_branch
      %85 = sbr.rel (0) target = $region29
    $region28: #{tpu_custom_call.1} parent=1 // pred_region
      %87 = dma.done [#allocation7], 16
    $region29: #{tpu_custom_call.1} parent=1 // pred_fallthru
      _
    // Predicated region
    $region30: #{tpu_custom_call.1} parent=1 // pred_check
      _
    $region31: #{tpu_custom_call.1} parent=1 // pred_check_branch
      %89 = sbr.rel (0) target = $region33
    $region32: #{tpu_custom_call.1} parent=1 // pred_region
      %91 = dma.done [#allocation7], 16
    $region33: #{tpu_custom_call.1} parent=1 // pred_fallthru
      _
    %92 = vsyncpa [#allocation3], 1
    %93 = vsyncpa [#allocation4], 1
    %94 = vsyncpa [#allocation7], 1

</llo_original>
